<compile_context>
chip_gen: v5e
topology: v5e:2x2
jax: 0.10.0
libtpu: 0.0.40
codegen_flags: <defaults>
</compile_context>

<pallas_src>
import functools

import jax
import jax.numpy as jnp
from jax.experimental import pallas as pl
from jax.experimental.pallas import tpu as pltpu


def _routing_caps_kernel(x_ref, w_ref, b_ref, mask_ref, groute_ref, gunit_ref,
                         segexp_ref, o_ref, *, N0, N1, eps):
    # Per grid step (BT = batch tile):
    #   x_ref      : (BT, N0*D0)    lane-dense input rows, matmul dtype
    #   w_ref      : (N0*D0, N1*D1) w[j*D0+i, k*D1+z] = W[k, j, i, z], matmul dtype
    #   b_ref      : (N0, N1)       b_t[j, k] = b[k, j, 0], f32
    #   mask_ref   : (N0, N0*D0)    block-diag mask: mask[j, j*D0+i] = 1
    #   groute_ref : (N1*D1, N1)    D1**-0.5 on each D1 segment (routing logits)
    #   gunit_ref  : (N1*D1, N1)    1.0 on each D1 segment (squash norm)
    #   segexp_ref : (N1, N1*D1)    broadcast-into-D1-segment matrix
    #   o_ref      : (BT, N1*D1)    lane-dense output rows
    BT = x_ref.shape[0]
    KL = x_ref.shape[1]          # N0 * D0
    NL = w_ref.shape[1]          # N1 * D1

    xt = x_ref[...]                                   # (BT, KL)  matmul dtype
    w = w_ref[...]                                    # (KL, NL)  matmul dtype
    mask = mask_ref[...]                              # (N0, KL)  matmul dtype
    b_t = b_ref[...].astype(jnp.float32)              # (N0, N1)
    g_route = groute_ref[...]                         # (NL, N1)  f32
    g_unit = gunit_ref[...]                           # (NL, N1)  f32
    e_exp = segexp_ref[...]                           # (N1, NL)  f32

    # ---- u[b,k,j,z] = sum_i x[b,j,i] W[k,j,i,z]  as one MXU matmul ----------
    # Block-diagonal x: x_bd[b*N0+j, j*D0+i] = x[b, j, i], zero elsewhere.
    x_bd = (xt[:, None, :] * mask[None, :, :]).reshape(BT * N0, KL)
    u_flat = jnp.dot(x_bd, w, preferred_element_type=jnp.float32)   # (BT*N0, NL)
    u3 = u_flat.reshape(BT, N0, NL)      # u3[b, j, k*D1+z] == u[b, k, j, z]

    # ---- us[b,k,z] = sum_m u[b,k,m,z] == (x @ w)[b, kz]  (direct matmul) ----
    us = jnp.dot(xt, w, preferred_element_type=jnp.float32)         # (BT, NL)

    # ---- routing logits c[b,j,k] = D1^-1/2 sum_z u3[b,j,kz] us[b,kz] --------
    # (the D1^-1/2 scale is folded into g_route)
    prod = (u3 * us[:, None, :]).reshape(BT * N0, NL)               # (BT*N0, NL)
    c = jnp.dot(prod, g_route, preferred_element_type=jnp.float32)  # (BT*N0, N1)
    c = c.reshape(BT, N0, N1)                                       # c[b, j, k]

    # ---- softmax over N1 (lane axis), exact divide, then + b ----------------
    c = c - jnp.max(c, axis=-1, keepdims=True)
    e = jnp.exp(c)
    c_sm = e / jnp.sum(e, axis=-1, keepdims=True) + b_t[None, :, :]  # (BT, N0, N1)

    # ---- s[b,k,z] = sum_j u[b,k,j,z] * c_sm[b,k,j] --------------------------
    c_exp = jnp.dot(c_sm.reshape(BT * N0, N1), e_exp,
                    preferred_element_type=jnp.float32).reshape(BT, N0, NL)
    s = jnp.sum(u3 * c_exp, axis=1)                                  # (BT, NL)

    # ---- squash over each D1 segment ----------------------------------------
    sq = jnp.dot(s * s, g_unit, preferred_element_type=jnp.float32)  # (BT, N1)
    norm = jnp.sqrt(sq)
    coef = 1.0 - jnp.exp(-norm)       # == 1 - 1/(exp(norm)+eps), stable near 0
    factor = coef / (norm + eps)                                     # (BT, N1)
    factor_exp = jnp.dot(factor, e_exp, preferred_element_type=jnp.float32)

    o_ref[...] = (s * factor_exp).astype(o_ref.dtype)


def routing_caps(x, W, b, *, eps=1e-20, block_b=256, matmul_dtype=None):
    """x: (B, N0, D0), W: (N1, N0, D0, D1), b: (N1, N0, 1) -> (B, N1, D1).

    matmul_dtype: dtype of the main MXU contraction operands.  Defaults to
    bfloat16 when x is float32 (peak MXU on all generations); accumulation and
    all softmax/squash math stay float32.
    """
    B, N0, D0 = x.shape
    N1, _, _, D1 = W.shape
    KL, NL = N0 * D0, N1 * D1
    out_dtype = x.dtype
    if matmul_dtype is None:
        matmul_dtype = jnp.bfloat16 if x.dtype == jnp.float32 else x.dtype

    # ---- plain-JAX parameter reshuffles (done once, folded by XLA) ----------
    w_r = jnp.transpose(W, (1, 2, 0, 3)).reshape(KL, NL).astype(matmul_dtype)
    b_t = jnp.transpose(b[..., 0], (1, 0)).astype(jnp.float32)        # (N0, N1)

    # Constant 0/1 selection matrices.
    cap_in = jax.lax.broadcasted_iota(jnp.int32, (N0, KL), 0)
    lane_in = jax.lax.broadcasted_iota(jnp.int32, (N0, KL), 1)
    mask_bd = (lane_in // D0 == cap_in).astype(matmul_dtype)          # (N0, KL)

    lane_out = jax.lax.broadcasted_iota(jnp.int32, (NL, N1), 0)
    cap_out = jax.lax.broadcasted_iota(jnp.int32, (NL, N1), 1)
    seg01 = (lane_out // D1 == cap_out).astype(jnp.float32)           # (NL, N1)
    g_unit = seg01                                                    # squash norm
    g_route = seg01 * jnp.float32(1.0 / (float(D1) ** 0.5))           # logit scale folded in
    seg_exp = jnp.transpose(seg01)                                    # (N1, NL)

    # Lane-dense input slab: one 128-wide row per batch element.
    x2d = x.reshape(B, KL).astype(matmul_dtype)

    # ---- batch-tile selection ------------------------------------------------
    # Multiple of 8 when tiling; aim for >=2 grid steps (B > 8) so both v7x
    # TensorCores get work under dimension_semantics=("parallel",).
    bt = min(block_b, B)
    if B > 8:
        two_step = ((-(-B // 2) + 7) // 8) * 8
        bt = min(bt, two_step)
        bt = max(8, (bt // 8) * 8)

    # ---- VMEM working-set estimate -> auto-shrink bt, set explicit limit ----
    in_item = jnp.dtype(matmul_dtype).itemsize
    out_item = jnp.dtype(out_dtype).itemsize

    def _step_bytes(btile):
        resident = 2 * (KL * NL * in_item + N0 * KL * in_item
                        + N0 * N1 * 4 + 2 * NL * N1 * 4 + N1 * NL * 4)
        io = 2 * btile * (KL * in_item + NL * out_item)
        inter = (btile * N0 * KL * max(in_item, 4)      # x_bd
                 + 3 * btile * N0 * NL * 4              # u3 / prod / c_exp
                 + 4 * btile * NL * 4)                  # us / s / factor_exp / out f32
        return resident + io + inter

    while bt > 8 and _step_bytes(bt) > 24 * 1024 * 1024:   # v7x-safe budget
        bt = max(8, ((bt // 2) // 8) * 8)
    vmem_limit = int(min(64 << 20, max(32 << 20, 2 * _step_bytes(bt))))

    grid = (pl.cdiv(B, bt),)

    kernel = functools.partial(_routing_caps_kernel, N0=N0, N1=N1, eps=eps)

    flops = int(2 * B * N0 * KL * NL          # u (block-diag matmul)
                + 2 * B * KL * NL             # us
                + 4 * B * N0 * NL * N1        # c contraction + expansion
                + 4 * B * NL * N1)            # squash norm + factor expansion
    transcendentals = int(B * N0 * N1 + 2 * B * N1)
    bytes_accessed = int(B * KL * in_item + B * NL * out_item
                         + KL * NL * in_item + N0 * KL * in_item
                         + (3 * NL * N1 + N0 * N1) * 4)

    out2d = pl.pallas_call(
        kernel,
        out_shape=jax.ShapeDtypeStruct((B, NL), out_dtype),
        grid_spec=pltpu.PrefetchScalarGridSpec(
            num_scalar_prefetch=0,
            grid=grid,
            in_specs=[
                pl.BlockSpec((bt, KL), lambda bi: (bi, 0)),   # x rows
                pl.BlockSpec((KL, NL), lambda bi: (0, 0)),    # W (resident)
                pl.BlockSpec((N0, N1), lambda bi: (0, 0)),    # b
                pl.BlockSpec((N0, KL), lambda bi: (0, 0)),    # block-diag mask
                pl.BlockSpec((NL, N1), lambda bi: (0, 0)),    # segment-sum (scaled)
                pl.BlockSpec((NL, N1), lambda bi: (0, 0)),    # segment-sum (unit)
                pl.BlockSpec((N1, NL), lambda bi: (0, 0)),    # segment-expand
            ],
            out_specs=pl.BlockSpec((bt, NL), lambda bi: (bi, 0)),
        ),
        compiler_params=pltpu.CompilerParams(
            dimension_semantics=("parallel",),
            vmem_limit_bytes=vmem_limit),
        cost_estimate=pl.CostEstimate(flops=flops,
                                      transcendentals=transcendentals,
                                      bytes_accessed=bytes_accessed),
    )(x2d, w_r, b_t, mask_bd, g_route, g_unit, seg_exp)

    return out2d.reshape(B, N1, D1)


def routing_caps_ref(x, W, b, eps=1e-20):
    """Pure-JAX reference matching the PyTorch forward exactly."""
    D1 = W.shape[-1]
    u = jnp.einsum('bji,kjiz->bkjz', x, W)                 # (B, N1, N0, D1)
    c = jnp.einsum('bnij,bnkj->bni', u, u)[..., None]      # (B, N1, N0, 1)
    c = c / jnp.sqrt(jnp.float32(D1))
    c = jax.nn.softmax(c, axis=1) + b                      # broadcast b (N1,N0,1)
    s = jnp.sum(u * c, axis=-2)                            # (B, N1, D1)
    norm = jnp.linalg.norm(s, ord=2, axis=-1, keepdims=True)
    coef = 1.0 - 1.0 / (jnp.exp(norm) + eps)
    unit = s / (norm + eps)
    return coef * unit


if __name__ == "__main__":
    # Small shapes consistent with the module: in_capsules=(8,16), out_capsules=(8,16).
    B, N0, D0, N1, D1 = 2, 8, 16, 8, 16

    key = jax.random.PRNGKey(0)
    kx, kw = jax.random.split(key)

    x = jax.random.normal(kx, (B, N0, D0), dtype=jnp.float32)

    # Deterministic kaiming_normal_-style init for W: std = sqrt(2 / fan_in).
    std = (2.0 / (N0 * D0 * D1)) ** 0.5
    W = std * jax.random.normal(kw, (N1, N0, D0, D1), dtype=jnp.float32)
    b = jnp.zeros((N1, N0, 1), dtype=jnp.float32)

    ref = routing_caps_ref(x, W, b)

    # f32 MXU path: near-exact.
    out_f32 = jax.block_until_ready(routing_caps(x, W, b, matmul_dtype=jnp.float32))
    assert out_f32.shape == (B, N1, D1), out_f32.shape
    assert jnp.allclose(out_f32, ref, atol=3e-3, rtol=3e-2), (
        float(jnp.max(jnp.abs(out_f32 - ref))))

    # Default path (bf16 MXU operands on f32 inputs): looser tolerance.
    out = jax.block_until_ready(routing_caps(x, W, b))
    assert out.shape == (B, N1, D1), out.shape
    assert jnp.allclose(out, ref, atol=3e-2, rtol=3e-1), (
        float(jnp.max(jnp.abs(out - ref))))

    # Multi-step grid (exercises batch tiling / partial last tile).
    B2 = 40
    x2 = jax.random.normal(jax.random.PRNGKey(1), (B2, N0, D0), dtype=jnp.float32)
    ref2 = routing_caps_ref(x2, W, b)
    out2 = jax.block_until_ready(routing_caps(x2, W, b))
    assert out2.shape == (B2, N1, D1), out2.shape
    assert jnp.allclose(out2, ref2, atol=3e-2, rtol=3e-1), (
        float(jnp.max(jnp.abs(out2 - ref2))))

    print("KERNEL_OK")
</pallas_src>

<mosaic_0001>
module attributes {stable_mosaic.version = 11 : i64} {
  func.func @_routing_caps_kernel(%arg0: i32, %arg1: memref<2x128xf32, #tpu.memory_space<vmem>>, %arg2: memref<128x128xf32, #tpu.memory_space<vmem>>, %arg3: memref<8x8xf32, #tpu.memory_space<vmem>>, %arg4: memref<8x128xf32, #tpu.memory_space<vmem>>, %arg5: memref<128x8xf32, #tpu.memory_space<vmem>>, %arg6: memref<128x8xf32, #tpu.memory_space<vmem>>, %arg7: memref<8x128xf32, #tpu.memory_space<vmem>>, %arg8: memref<2x128xf32, #tpu.memory_space<vmem>>) attributes {dimension_semantics = [#tpu.dimension_semantics<parallel>], iteration_bounds = array<i64: 1>, scalar_prefetch = 0 : i64, scratch_operands = 0 : i64, tpu.core_type = #tpu.core_type<tc>, window_params = [{transform_indices = @transform_0, window_bounds = array<i64: 2, 128>}, {pipeline_mode = #tpu.pipeline_mode<synchronous>, transform_indices = @transform_1, window_bounds = array<i64: 128, 128>}, {pipeline_mode = #tpu.pipeline_mode<synchronous>, transform_indices = @transform_2, window_bounds = array<i64: 8, 8>}, {pipeline_mode = #tpu.pipeline_mode<synchronous>, transform_indices = @transform_3, window_bounds = array<i64: 8, 128>}, {pipeline_mode = #tpu.pipeline_mode<synchronous>, transform_indices = @transform_4, window_bounds = array<i64: 128, 8>}, {pipeline_mode = #tpu.pipeline_mode<synchronous>, transform_indices = @transform_5, window_bounds = array<i64: 128, 8>}, {pipeline_mode = #tpu.pipeline_mode<synchronous>, transform_indices = @transform_6, window_bounds = array<i64: 8, 128>}, {transform_indices = @transform_7, window_bounds = array<i64: 2, 128>}]} {
    %c0 = arith.constant 0 : index
    %c0_0 = arith.constant 0 : index
    %0 = vector.load %arg1[%c0, %c0_0] : memref<2x128xf32, #tpu.memory_space<vmem>>, vector<2x128xf32>
    %c0_1 = arith.constant 0 : index
    %c0_2 = arith.constant 0 : index
    %1 = vector.load %arg2[%c0_1, %c0_2] : memref<128x128xf32, #tpu.memory_space<vmem>>, vector<128x128xf32>
    %c0_3 = arith.constant 0 : index
    %c0_4 = arith.constant 0 : index
    %2 = vector.load %arg4[%c0_3, %c0_4] : memref<8x128xf32, #tpu.memory_space<vmem>>, vector<8x128xf32>
    %c0_5 = arith.constant 0 : index
    %c0_6 = arith.constant 0 : index
    %3 = vector.load %arg3[%c0_5, %c0_6] : memref<8x8xf32, #tpu.memory_space<vmem>>, vector<8x8xf32>
    %c0_7 = arith.constant 0 : index
    %c0_8 = arith.constant 0 : index
    %4 = vector.load %arg5[%c0_7, %c0_8] : memref<128x8xf32, #tpu.memory_space<vmem>>, vector<128x8xf32>
    %c0_9 = arith.constant 0 : index
    %c0_10 = arith.constant 0 : index
    %5 = vector.load %arg6[%c0_9, %c0_10] : memref<128x8xf32, #tpu.memory_space<vmem>>, vector<128x8xf32>
    %c0_11 = arith.constant 0 : index
    %c0_12 = arith.constant 0 : index
    %6 = vector.load %arg7[%c0_11, %c0_12] : memref<8x128xf32, #tpu.memory_space<vmem>>, vector<8x128xf32>
    %7 = vector.shape_cast %0 : vector<2x128xf32> to vector<2x1x128xf32>
    %8 = vector.shape_cast %2 : vector<8x128xf32> to vector<1x8x128xf32>
    %9 = vector.broadcast %7 : vector<2x1x128xf32> to vector<2x8x128xf32>
    %10 = vector.broadcast %8 : vector<1x8x128xf32> to vector<2x8x128xf32>
    %11 = arith.mulf %9, %10 : vector<2x8x128xf32>
    %12 = vector.shape_cast %11 : vector<2x8x128xf32> to vector<16x128xf32>
    %cst = arith.constant dense<0.000000e+00> : vector<16x128xf32>
    %13 = tpu.matmul %12, %1, %cst {dimension_numbers = #tpu.dot_dimension_numbers<[1], [0], [0], [1], [0, 0, 1, 1], [], []>} : vector<16x128xf32>, vector<128x128xf32>, vector<16x128xf32> -> vector<16x128xf32>
    %14 = vector.shape_cast %13 : vector<16x128xf32> to vector<2x8x128xf32>
    %cst_13 = arith.constant dense<0.000000e+00> : vector<2x128xf32>
    %15 = tpu.matmul %0, %1, %cst_13 {dimension_numbers = #tpu.dot_dimension_numbers<[1], [0], [0], [1], [0, 0, 1, 1], [], []>} : vector<2x128xf32>, vector<128x128xf32>, vector<2x128xf32> -> vector<2x128xf32>
    %16 = vector.shape_cast %15 : vector<2x128xf32> to vector<2x1x128xf32>
    %17 = vector.broadcast %16 : vector<2x1x128xf32> to vector<2x8x128xf32>
    %18 = arith.mulf %14, %17 : vector<2x8x128xf32>
    %19 = vector.shape_cast %18 : vector<2x8x128xf32> to vector<16x128xf32>
    %cst_14 = arith.constant dense<0.000000e+00> : vector<16x8xf32>
    %20 = tpu.matmul %19, %4, %cst_14 {dimension_numbers = #tpu.dot_dimension_numbers<[1], [0], [0], [1], [0, 0, 1, 1], [], []>} : vector<16x128xf32>, vector<128x8xf32>, vector<16x8xf32> -> vector<16x8xf32>
    %21 = vector.shape_cast %20 : vector<16x8xf32> to vector<2x8x8xf32>
    %cst_15 = arith.constant dense<0xFF800000> : vector<2x8xf32>
    %22 = vector.multi_reduction <maximumf>, %21, %cst_15 [2] : vector<2x8x8xf32> to vector<2x8xf32>
    %23 = vector.shape_cast %22 : vector<2x8xf32> to vector<2x8x1xf32>
    %24 = vector.broadcast %23 : vector<2x8x1xf32> to vector<2x8x8xf32>
    %25 = arith.subf %21, %24 : vector<2x8x8xf32>
    %26 = math.exp %25 : vector<2x8x8xf32>
    %cst_16 = arith.constant dense<0.000000e+00> : vector<2x8xf32>
    %27 = vector.multi_reduction <add>, %26, %cst_16 [2] : vector<2x8x8xf32> to vector<2x8xf32>
    %28 = vector.shape_cast %27 : vector<2x8xf32> to vector<2x8x1xf32>
    %29 = vector.broadcast %28 : vector<2x8x1xf32> to vector<2x8x8xf32>
    %30 = arith.divf %26, %29 : vector<2x8x8xf32>
    %31 = vector.shape_cast %3 : vector<8x8xf32> to vector<1x8x8xf32>
    %32 = vector.broadcast %31 : vector<1x8x8xf32> to vector<2x8x8xf32>
    %33 = arith.addf %30, %32 : vector<2x8x8xf32>
    %34 = vector.shape_cast %33 : vector<2x8x8xf32> to vector<16x8xf32>
    %cst_17 = arith.constant dense<0.000000e+00> : vector<16x128xf32>
    %35 = tpu.matmul %34, %6, %cst_17 {dimension_numbers = #tpu.dot_dimension_numbers<[1], [0], [0], [1], [0, 0, 1, 1], [], []>} : vector<16x8xf32>, vector<8x128xf32>, vector<16x128xf32> -> vector<16x128xf32>
    %36 = vector.shape_cast %35 : vector<16x128xf32> to vector<2x8x128xf32>
    %37 = arith.mulf %14, %36 : vector<2x8x128xf32>
    %cst_18 = arith.constant dense<0.000000e+00> : vector<2x128xf32>
    %38 = vector.multi_reduction <add>, %37, %cst_18 [1] : vector<2x8x128xf32> to vector<2x128xf32>
    %39 = arith.mulf %38, %38 : vector<2x128xf32>
    %cst_19 = arith.constant dense<0.000000e+00> : vector<2x8xf32>
    %40 = tpu.matmul %39, %5, %cst_19 {dimension_numbers = #tpu.dot_dimension_numbers<[1], [0], [0], [1], [0, 0, 1, 1], [], []>} : vector<2x128xf32>, vector<128x8xf32>, vector<2x8xf32> -> vector<2x8xf32>
    %41 = math.sqrt %40 : vector<2x8xf32>
    %cst_20 = arith.constant 0.000000e+00 : f32
    %42 = vector.broadcast %cst_20 : f32 to vector<2x8xf32>
    %43 = arith.subf %42, %41 : vector<2x8xf32>
    %44 = math.exp %43 : vector<2x8xf32>
    %cst_21 = arith.constant 1.000000e+00 : f32
    %45 = vector.broadcast %cst_21 : f32 to vector<2x8xf32>
    %46 = arith.subf %45, %44 : vector<2x8xf32>
    %cst_22 = arith.constant 9.99999968E-21 : f32
    %47 = vector.broadcast %cst_22 : f32 to vector<2x8xf32>
    %48 = arith.addf %41, %47 : vector<2x8xf32>
    %49 = arith.divf %46, %48 : vector<2x8xf32>
    %cst_23 = arith.constant dense<0.000000e+00> : vector<2x128xf32>
    %50 = tpu.matmul %49, %6, %cst_23 {dimension_numbers = #tpu.dot_dimension_numbers<[1], [0], [0], [1], [0, 0, 1, 1], [], []>} : vector<2x8xf32>, vector<8x128xf32>, vector<2x128xf32> -> vector<2x128xf32>
    %51 = arith.mulf %38, %50 : vector<2x128xf32>
    %c0_24 = arith.constant 0 : index
    %c0_25 = arith.constant 0 : index
    %52 = vector.load %arg8[%c0_24, %c0_25] : memref<2x128xf32, #tpu.memory_space<vmem>>, vector<2x128xf32>
    tpu.vector_store %arg8[%c0_24, %c0_25], %51 {strides = array<i32>} : memref<2x128xf32, #tpu.memory_space<vmem>>, vector<2x128xf32>,
    return
  }
  func.func @transform_0(%arg0: i32) -> (i32, i32) {
    %c0_i32 = arith.constant 0 : i32
    %c0_i32_0 = arith.constant 0 : i32
    return %arg0, %c0_i32 : i32, i32
  }
  func.func @transform_1(%arg0: i32) -> (i32, i32) {
    %c0_i32 = arith.constant 0 : i32
    %c0_i32_0 = arith.constant 0 : i32
    %c0_i32_1 = arith.constant 0 : i32
    return %c0_i32, %c0_i32_0 : i32, i32
  }
  func.func @transform_2(%arg0: i32) -> (i32, i32) {
    %c0_i32 = arith.constant 0 : i32
    %c0_i32_0 = arith.constant 0 : i32
    %c0_i32_1 = arith.constant 0 : i32
    return %c0_i32, %c0_i32_0 : i32, i32
  }
  func.func @transform_3(%arg0: i32) -> (i32, i32) {
    %c0_i32 = arith.constant 0 : i32
    %c0_i32_0 = arith.constant 0 : i32
    %c0_i32_1 = arith.constant 0 : i32
    return %c0_i32, %c0_i32_0 : i32, i32
  }
  func.func @transform_4(%arg0: i32) -> (i32, i32) {
    %c0_i32 = arith.constant 0 : i32
    %c0_i32_0 = arith.constant 0 : i32
    %c0_i32_1 = arith.constant 0 : i32
    return %c0_i32, %c0_i32_0 : i32, i32
  }
  func.func @transform_5(%arg0: i32) -> (i32, i32) {
    %c0_i32 = arith.constant 0 : i32
    %c0_i32_0 = arith.constant 0 : i32
    %c0_i32_1 = arith.constant 0 : i32
    return %c0_i32, %c0_i32_0 : i32, i32
  }
  func.func @transform_6(%arg0: i32) -> (i32, i32) {
    %c0_i32 = arith.constant 0 : i32
    %c0_i32_0 = arith.constant 0 : i32
    %c0_i32_1 = arith.constant 0 : i32
    return %c0_i32, %c0_i32_0 : i32, i32
  }
  func.func @transform_7(%arg0: i32) -> (i32, i32) {
    %c0_i32 = arith.constant 0 : i32
    %c0_i32_0 = arith.constant 0 : i32
    return %arg0, %c0_i32 : i32, i32
  }
}

</mosaic_0001>

<llo_original>
// kernel: tpu_custom_call.1
$region0: #{tpu_custom_call.1}
  #allocation0 [shape = 'u32[]', space=smem, size = 0x4, offset = 0x4, fixed_abs, tag = 'smem constant byte address 0x4 - core index']
  #allocation1 [shape = 'u32[72,128]{1,0:T(1,128)}', space=vmem, size = 0x9000, scoped, tag = 'internal scratch']
  %s0 = inlined_call_operand.vmem [shape: f32[2,128], index: 0, kind: input, shape index: {}]
  %s1 = inlined_call_operand.vmem [shape: f32[128,128], index: 1, kind: input, shape index: {}]
  %s2 = inlined_call_operand.vmem [shape: f32[8,8], index: 2, kind: input, shape index: {}]
  %s3 = inlined_call_operand.vmem [shape: f32[8,128], index: 3, kind: input, shape index: {}]
  %s4 = inlined_call_operand.vmem [shape: f32[128,8], index: 4, kind: input, shape index: {}]
  %s5 = inlined_call_operand.vmem [shape: f32[128,8], index: 5, kind: input, shape index: {}]
  %s6 = inlined_call_operand.vmem [shape: f32[8,128], index: 6, kind: input, shape index: {}]
  %s7 = inlined_call_operand.hbm [shape: f32[2,128], index: 7, kind: output, shape index: {}]
  %s8 = sld [smem:[#allocation0]]
  $region38: #{tpu_custom_call.1} parent=0
    _
  %s10 = ssub.s32 1, %s8
  %s11 = scalar_select 0, %s10, %s8
  $region1: #{tpu_custom_call.1} parent=0
    #allocation2 [shape = 'u8[1024]{0}', space=vmem, size = 0x400, scoped, tag = 'output window, operand 0, single buffered']
    #allocation3 [shape = 's32[1]{0}', space=sflag, size = 0x4, scoped, tag = 'scoped memory for tpu_custom_call.1']
    %12 = vsyncpa [#allocation3], 0
    // Predicated region
    $region2: #{tpu_custom_call.1} parent=1 // pred_check
      _
    $region3: #{tpu_custom_call.1} parent=1 // pred_check_branch
      %14 = sbr.rel (0) target = $region5
    $region4: #{tpu_custom_call.1} parent=1 // pred_region
      _
    $region5: #{tpu_custom_call.1} parent=1 // pred_fallthru
      _
    // Predicated region
    $region6: #{tpu_custom_call.1} parent=1 // pred_check
      _
    $region7: #{tpu_custom_call.1} parent=1 // pred_check_branch
      %16 = sbr.rel (0) target = $region9
    $region8: #{tpu_custom_call.1} parent=1 // pred_region
      _
    $region9: #{tpu_custom_call.1} parent=1 // pred_fallthru
      _
    // Predicated region
    $region10: #{tpu_custom_call.1} parent=1 // pred_check
      _
    $region11: #{tpu_custom_call.1} parent=1 // pred_check_branch
      %18 = sbr.rel (0) target = $region13
    $region12: #{tpu_custom_call.1} parent=1 // pred_region
      _
    $region13: #{tpu_custom_call.1} parent=1 // pred_fallthru
      _
    // Predicated region
    $region14: #{tpu_custom_call.1} parent=1 // pred_check
      _
    $region15: #{tpu_custom_call.1} parent=1 // pred_check_branch
      %20 = sbr.rel (0) target = $region17
    $region16: #{tpu_custom_call.1} parent=1 // pred_region
      _
    $region17: #{tpu_custom_call.1} parent=1 // pred_fallthru
      _
    // Predicated region
    $region18: #{tpu_custom_call.1} parent=1 // pred_check
      _
    $region19: #{tpu_custom_call.1} parent=1 // pred_check_branch
      %22 = sbr.rel (0) target = $region21
    $region20: #{tpu_custom_call.1} parent=1 // pred_region
      _
    $region21: #{tpu_custom_call.1} parent=1 // pred_fallthru
      _
    // Predicated region
    $region22: #{tpu_custom_call.1} parent=1 // pred_check
      _
    $region23: #{tpu_custom_call.1} parent=1 // pred_check_branch
      %24 = sbr.rel (0) target = $region25
    $region24: #{tpu_custom_call.1} parent=1 // pred_region
      _
    $region25: #{tpu_custom_call.1} parent=1 // pred_fallthru
      _
    // Predicated region
    $region26: #{tpu_custom_call.1} parent=1 // pred_check
      _
    $region27: #{tpu_custom_call.1} parent=1 // pred_check_branch
      %26 = sbr.rel (0) target = $region29
    $region28: #{tpu_custom_call.1} parent=1 // pred_region
      _
    $region29: #{tpu_custom_call.1} parent=1 // pred_fallthru
      _
    %v27 = vld [vmem:[%s0] sm:$0x3]
    %v28 = vld [vmem:[%s1] sm:$0xff]
    %v29 = vld [vmem:[%s1 + $0x8] sm:$0xff]
    %v30 = vld [vmem:[%s1 + $0x10] sm:$0xff]
    %v31 = vld [vmem:[%s1 + $0x18] sm:$0xff]
    %v32 = vld [vmem:[%s1 + $0x20] sm:$0xff]
    %v33 = vld [vmem:[%s1 + $0x28] sm:$0xff]
    %v34 = vld [vmem:[%s1 + $0x30] sm:$0xff]
    %v35 = vld [vmem:[%s1 + $0x38] sm:$0xff]
    %v36 = vld [vmem:[%s1 + $0x40] sm:$0xff]
    %v37 = vld [vmem:[%s1 + $0x48] sm:$0xff]
    %v38 = vld [vmem:[%s1 + $0x50] sm:$0xff]
    %v39 = vld [vmem:[%s1 + $0x58] sm:$0xff]
    %v40 = vld [vmem:[%s1 + $0x60] sm:$0xff]
    %v41 = vld [vmem:[%s1 + $0x68] sm:$0xff]
    %v42 = vld [vmem:[%s1 + $0x70] sm:$0xff]
    %v43 = vld [vmem:[%s1 + $0x78] sm:$0xff]
    %v44 = vld [vmem:[%s3] sm:$0xff]
    %v45 = vld [vmem:[%s2] sm:$0xff]
    %v46 = vld [vmem:[%s4] sm:$0xff]
    %v47 = vld [vmem:[%s4 + $0x8] sm:$0xff]
    %v48 = vld [vmem:[%s4 + $0x10] sm:$0xff]
    %v49 = vld [vmem:[%s4 + $0x18] sm:$0xff]
    %v50 = vld [vmem:[%s4 + $0x20] sm:$0xff]
    %v51 = vld [vmem:[%s4 + $0x28] sm:$0xff]
    %v52 = vld [vmem:[%s4 + $0x30] sm:$0xff]
    %v53 = vld [vmem:[%s4 + $0x38] sm:$0xff]
    %v54 = vld [vmem:[%s4 + $0x40] sm:$0xff]
    %v55 = vld [vmem:[%s4 + $0x48] sm:$0xff]
    %v56 = vld [vmem:[%s4 + $0x50] sm:$0xff]
    %v57 = vld [vmem:[%s4 + $0x58] sm:$0xff]
    %v58 = vld [vmem:[%s4 + $0x60] sm:$0xff]
    %v59 = vld [vmem:[%s4 + $0x68] sm:$0xff]
    %v60 = vld [vmem:[%s4 + $0x70] sm:$0xff]
    %v61 = vld [vmem:[%s4 + $0x78] sm:$0xff]
    %v62 = vld [vmem:[%s5] sm:$0xff]
    %v63 = vld [vmem:[%s5 + $0x8] sm:$0xff]
    %v64 = vld [vmem:[%s5 + $0x10] sm:$0xff]
    %v65 = vld [vmem:[%s5 + $0x18] sm:$0xff]
    %v66 = vld [vmem:[%s5 + $0x20] sm:$0xff]
    %v67 = vld [vmem:[%s5 + $0x28] sm:$0xff]
    %v68 = vld [vmem:[%s5 + $0x30] sm:$0xff]
    %v69 = vld [vmem:[%s5 + $0x38] sm:$0xff]
    %v70 = vld [vmem:[%s5 + $0x40] sm:$0xff]
    %v71 = vld [vmem:[%s5 + $0x48] sm:$0xff]
    %v72 = vld [vmem:[%s5 + $0x50] sm:$0xff]
    %v73 = vld [vmem:[%s5 + $0x58] sm:$0xff]
    %v74 = vld [vmem:[%s5 + $0x60] sm:$0xff]
    %v75 = vld [vmem:[%s5 + $0x68] sm:$0xff]
    %v76 = vld [vmem:[%s5 + $0x70] sm:$0xff]
    %v77 = vld [vmem:[%s5 + $0x78] sm:$0xff]
    %v78 = vld [vmem:[%s6] sm:$0xff]
    %v80 = vrot.slane %v27, 1
    %v81 = vperm.slane %v27, 0
    %v82 = vperm.slane %v80, 0
    %v85 = vmul.f32 %v81, %v44
    %v86 = vmul.f32 %v82, %v44
    %87 = vmatpush.msra.mxu0 %v43
    %88 = vmatpush.msra.mxu0 %v42
    %89 = vmatpush.msra.mxu0 %v41
    %90 = vmatpush.msra.mxu0 %v40
    %91 = vmatpush.msra.mxu0 %v39
    %92 = vmatpush.msra.mxu0 %v38
    %93 = vmatpush.msra.mxu0 %v37
    %94 = vmatpush.msra.mxu0 %v36
    %95 = vmatpush.msra.mxu0 %v35
    %96 = vmatpush.msra.mxu0 %v34
    %97 = vmatpush.msra.mxu0 %v33
    %98 = vmatpush.msra.mxu0 %v32
    %99 = vmatpush.msra.mxu0 %v31
    %100 = vmatpush.msra.mxu0 %v30
    %101 = vmatpush.msra.mxu0 %v29
    %102 = vmatpush.msra.mxu0 %v28
    %103 = vmatmul.f32.gmra.mxu0 %v85
    %v104 = vpop.f32.mrf.mxu0
    %v105 = vadd.f32 0.0, %v104
    %106 = vmatmul.f32.gmra.mxu0 %v86
    %v107 = vpop.f32.mrf.mxu0
    %v108 = vadd.f32 0.0, %v107
    %109 = vdwg.mxu0
    %110 = vmatpush.msra.mxu0 %v43
    %111 = vmatpush.msra.mxu0 %v42
    %112 = vmatpush.msra.mxu0 %v41
    %113 = vmatpush.msra.mxu0 %v40
    %114 = vmatpush.msra.mxu0 %v39
    %115 = vmatpush.msra.mxu0 %v38
    %116 = vmatpush.msra.mxu0 %v37
    %117 = vmatpush.msra.mxu0 %v36
    %118 = vmatpush.msra.mxu0 %v35
    %119 = vmatpush.msra.mxu0 %v34
    %120 = vmatpush.msra.mxu0 %v33
    %121 = vmatpush.msra.mxu0 %v32
    %122 = vmatpush.msra.mxu0 %v31
    %123 = vmatpush.msra.mxu0 %v30
    %124 = vmatpush.msra.mxu0 %v29
    %125 = vmatpush.msra.mxu0 %v28
    %126 = vmatmul.f32.gmra.mxu0 %v27
    %v127 = vpop.f32.mrf.mxu0
    %v128 = vadd.f32 0.0, %v127
    %129 = vdwg.mxu0
    %v131 = vrot.slane %v128, 1
    %v132 = vperm.slane %v128, 0
    %v133 = vperm.slane %v131, 0
    %v136 = vmul.f32 %v105, %v132
    %v137 = vmul.f32 %v108, %v133
    %138 = vmatpush.msra.mxu0 %v61
    %139 = vmatpush.msra.mxu0 %v60
    %140 = vmatpush.msra.mxu0 %v59
    %141 = vmatpush.msra.mxu0 %v58
    %142 = vmatpush.msra.mxu0 %v57
    %143 = vmatpush.msra.mxu0 %v56
    %144 = vmatpush.msra.mxu0 %v55
    %145 = vmatpush.msra.mxu0 %v54
    %146 = vmatpush.msra.mxu0 %v53
    %147 = vmatpush.msra.mxu0 %v52
    %148 = vmatpush.msra.mxu0 %v51
    %149 = vmatpush.msra.mxu0 %v50
    %150 = vmatpush.msra.mxu0 %v49
    %151 = vmatpush.msra.mxu0 %v48
    %152 = vmatpush.msra.mxu0 %v47
    %153 = vmatpush.msra.mxu0 %v46
    %154 = vmatmul.f32.gmra.mxu0 %v136
    %v155 = vpop.f32.mrf.mxu0
    %v156 = vadd.f32 0.0, %v155
    %157 = vmatmul.f32.gmra.mxu0 %v137
    %v158 = vpop.f32.mrf.mxu0
    %v159 = vadd.f32 0.0, %v158
    %160 = vdwg.mxu0
    %vm161 = vcmask 64512
    %v162 = vsel %vm161, %v156, -inf
    %163 = vmax.xlane.f32.xlu0 %v162
    %v164 = vpop.xlane.xlu0 %163
    %v165 = vsel %vm161, %v159, -inf
    %166 = vmax.xlane.f32.xlu0 %v165
    %v167 = vpop.xlane.xlu0 %166
    %v168 = vsub.f32 %v156, %v164
    %v169 = vsub.f32 %v159, %v167
    %v170 = vmul.f32 %v168, 1.442695
    %v171 = vpow.pop %v170
    %v172 = vmul.f32 %v169, 1.442695
    %v173 = vpow.pop %v172
    %v174 = vsel %vm161, %v171, 0.0
    %175 = vadd.xlane.f32.xlu0 %v174
    %v176 = vpop.xlane.xlu0 %175
    %v177 = vsel %vm161, %v173, 0.0
    %178 = vadd.xlane.f32.xlu0 %v177
    %v179 = vpop.xlane.xlu0 %178
    %v180 = vrcp.pop %v176
    %v181 = vmul.f32 %v176, %v180
    %v182 = vsub.f32 1.0, %v181
    %v183 = vmul.f32 %v180, %v182
    %v184 = vadd.f32 %v180, %v183
    %vm185 = vweird.f32 %v176
    %vm186 = vweird.f32 %v180
    %vm187 = vmor %vm185, %vm186
    %v188 = vsel %vm187, %v180, %v184
    %v189 = vand.u32 2147483647, %v176
    %vm190 = vcmp.eq.f32.partialorder %v189, 8.507059e+37
    %v191 = vand.u32 %v176, 2147483648
    %v192 = vor.u32 1.1754944e-38, %v191
    %v193 = vsel %vm190, %v192, %v188
    %v194 = vmul.f32 %v171, %v193
    %v195 = vrcp.pop %v179
    %v196 = vmul.f32 %v179, %v195
    %v197 = vsub.f32 1.0, %v196
    %v198 = vmul.f32 %v195, %v197
    %v199 = vadd.f32 %v195, %v198
    %vm200 = vweird.f32 %v179
    %vm201 = vweird.f32 %v195
    %vm202 = vmor %vm200, %vm201
    %v203 = vsel %vm202, %v195, %v199
    %v204 = vand.u32 2147483647, %v179
    %vm205 = vcmp.eq.f32.partialorder %v204, 8.507059e+37
    %v206 = vand.u32 %v179, 2147483648
    %v207 = vor.u32 1.1754944e-38, %v206
    %v208 = vsel %vm205, %v207, %v203
    %v209 = vmul.f32 %v173, %v208
    %v210 = vadd.f32 %v194, %v45
    %v211 = vadd.f32 %v209, %v45
    %v213 = vsel %vm161, %v210, 0
    %v216 = vsel %vm161, %v211, 0
    %218 = vmatpush.msra.mxu0 0.0
    %219 = vmatpush.msra.mxu0 0.0
    %220 = vmatpush.msra.mxu0 0.0
    %221 = vmatpush.msra.mxu0 0.0
    %222 = vmatpush.msra.mxu0 0.0
    %223 = vmatpush.msra.mxu0 0.0
    %224 = vmatpush.msra.mxu0 0.0
    %225 = vmatpush.msra.mxu0 0.0
    %226 = vmatpush.msra.mxu0 0.0
    %227 = vmatpush.msra.mxu0 0.0
    %228 = vmatpush.msra.mxu0 0.0
    %229 = vmatpush.msra.mxu0 0.0
    %230 = vmatpush.msra.mxu0 0.0
    %231 = vmatpush.msra.mxu0 0.0
    %232 = vmatpush.msra.mxu0 0.0
    %233 = vmatpush.msra.mxu0 %v78
    %234 = vmatmul.f32.gmra.mxu0 %v213
    %v235 = vpop.f32.mrf.mxu0
    %v236 = vadd.f32 0.0, %v235
    %237 = vmatmul.f32.gmra.mxu0 %v216
    %v238 = vpop.f32.mrf.mxu0
    %v239 = vadd.f32 0.0, %v238
    %240 = vdwg.mxu0
    %v241 = vmul.f32 %v105, %v236
    %v242 = vmul.f32 %v108, %v239
    %v243 = vrot.slane %v241, 4
    %v244 = vadd.f32 %v241, %v243
    %v245 = vrot.slane %v244, 2
    %v246 = vadd.f32 %v244, %v245
    %v247 = vrot.slane %v246, 1
    %v248 = vadd.f32 %v246, %v247
    %v249 = vrot.slane %v242, 4
    %v250 = vadd.f32 %v242, %v249
    %v251 = vrot.slane %v250, 2
    %v252 = vadd.f32 %v250, %v251
    %v253 = vrot.slane %v252, 1
    %v254 = vadd.f32 %v252, %v253
    %v255 = vmul.f32 %v248, %v248
    %v256 = vmul.f32 %v254, %v254
    %vm259 = vcmask 1041409
    %v260 = vsel %vm259, %v256, %v255
    %262 = vmatpush.msra.mxu0 %v77
    %263 = vmatpush.msra.mxu0 %v76
    %264 = vmatpush.msra.mxu0 %v75
    %265 = vmatpush.msra.mxu0 %v74
    %266 = vmatpush.msra.mxu0 %v73
    %267 = vmatpush.msra.mxu0 %v72
    %268 = vmatpush.msra.mxu0 %v71
    %269 = vmatpush.msra.mxu0 %v70
    %270 = vmatpush.msra.mxu0 %v69
    %271 = vmatpush.msra.mxu0 %v68
    %272 = vmatpush.msra.mxu0 %v67
    %273 = vmatpush.msra.mxu0 %v66
    %274 = vmatpush.msra.mxu0 %v65
    %275 = vmatpush.msra.mxu0 %v64
    %276 = vmatpush.msra.mxu0 %v63
    %277 = vmatpush.msra.mxu0 %v62
    %278 = vmatmul.f32.gmra.mxu0 %v260
    %v279 = vpop.f32.mrf.mxu0
    %v280 = vadd.f32 0.0, %v279
    %281 = vdwg.mxu0
    %v282 = vrsqrt.pop %v280
    %v283 = vmul.f32 %v282, %v280
    %v284 = vmul.f32 %v283, %v282
    %v285 = vmul.f32 0.5, %v284
    %v286 = vsub.f32 1.5, %v285
    %v287 = vmul.f32 %v282, %v286
    %v288 = vmul.f32 %v280, %v287
    %vm289 = vcmp.eq.f32.partialorder %v280, inf
    %v290 = vsel %vm289, %v280, %v288
    %vm291 = vcmp.eq.f32.partialorder %v280, 0.0
    %v292 = vand.u32 %v280, 2147483648
    %v293 = vsel %vm291, %v292, %v290
    %v294 = vsub.f32 0.0, %v293
    %v295 = vmul.f32 %v294, 1.442695
    %v296 = vpow.pop %v295
    %v297 = vsub.f32 1.0, %v296
    %v298 = vadd.f32 %v293, 1e-20
    %v299 = vrcp.pop %v298
    %v300 = vmul.f32 %v298, %v299
    %v301 = vsub.f32 1.0, %v300
    %v302 = vmul.f32 %v299, %v301
    %v303 = vadd.f32 %v299, %v302
    %vm304 = vweird.f32 %v298
    %vm305 = vweird.f32 %v299
    %vm306 = vmor %vm304, %vm305
    %v307 = vsel %vm306, %v299, %v303
    %v308 = vand.u32 2147483647, %v298
    %vm309 = vcmp.eq.f32.partialorder %v308, 8.507059e+37
    %v310 = vand.u32 %v298, 2147483648
    %v311 = vor.u32 1.1754944e-38, %v310
    %v312 = vsel %vm309, %v311, %v307
    %v313 = vmul.f32 %v297, %v312
    %v315 = vsel %vm161, %v313, 0
    %317 = vmatpush.msra.mxu0 0.0
    %318 = vmatpush.msra.mxu0 0.0
    %319 = vmatpush.msra.mxu0 0.0
    %320 = vmatpush.msra.mxu0 0.0
    %321 = vmatpush.msra.mxu0 0.0
    %322 = vmatpush.msra.mxu0 0.0
    %323 = vmatpush.msra.mxu0 0.0
    %324 = vmatpush.msra.mxu0 0.0
    %325 = vmatpush.msra.mxu0 0.0
    %326 = vmatpush.msra.mxu0 0.0
    %327 = vmatpush.msra.mxu0 0.0
    %328 = vmatpush.msra.mxu0 0.0
    %329 = vmatpush.msra.mxu0 0.0
    %330 = vmatpush.msra.mxu0 0.0
    %331 = vmatpush.msra.mxu0 0.0
    %332 = vmatpush.msra.mxu0 %v78
    %333 = vmatmul.f32.gmra.mxu0 %v315
    %v334 = vpop.f32.mrf.mxu0
    %v335 = vadd.f32 0.0, %v334
    %336 = vdwg.mxu0
    %v338 = vrot.slane %v335, 1
    %v341 = vmul.f32 %v248, %v335
    %v342 = vmul.f32 %v254, %v338
    %v345 = vrot.slane %v342, 7
    %v346 = vsel %vm259, %v345, %v341
    %348 = vst [vmem:[#allocation2] sm:$0x3] %v346
    // Predicated region
    $region30: #{tpu_custom_call.1} parent=1 // pred_check
      _
    $region31: #{tpu_custom_call.1} parent=1 // pred_check_branch
      %350 = sbr.rel (0) target = $region33
    $region32: #{tpu_custom_call.1} parent=1 // pred_region
      %352 = vsyncadd [#allocation3], 0
      %s354 = sshll.u32 [#allocation2], 4
      %s355 = int_to_ptr.vmem [resolvable:$true] %s354
      %s356 = sshll.u32 %s7, 4
      %s357 = int_to_ptr.hbm [resolvable:$true] %s356
      %359 = dma.vmem_to_hbm [thread:$0]  %s355, 32, %s357, [#allocation3]
    $region33: #{tpu_custom_call.1} parent=1 // pred_fallthru
      _
    // Predicated region
    $region34: #{tpu_custom_call.1} parent=1 // pred_check
      _
    $region35: #{tpu_custom_call.1} parent=1 // pred_check_branch
      %361 = sbr.rel (0) target = $region37
    $region36: #{tpu_custom_call.1} parent=1 // pred_region
      %363 = dma.done [#allocation3], 32
    $region37: #{tpu_custom_call.1} parent=1 // pred_fallthru
      _
    %364 = vsyncpa [#allocation3], 1

</llo_original>
